<compile_context>
chip_gen: v6e
topology: v6e:2x2x1
jax: 0.10.0
libtpu: 0.0.40
codegen_flags: <defaults>
</compile_context>

<pallas_src>
import functools

import numpy as np
import jax
import jax.numpy as jnp
from jax import lax
from jax.experimental import pallas as pl
from jax.experimental.pallas import tpu as pltpu


# --------------------------------------------------------------------------
# Roll-direction probe: the whole im2col construction relies on
#   rotated[..., p] == h[..., (p + s) % L]   (left-rotate by s).
# Guard that invariant (flagged in review) by probing pltpu.roll once.
# --------------------------------------------------------------------------
@functools.lru_cache(maxsize=None)
def _pltpu_roll_matches_jnp_roll():
    def probe(x_ref, o_ref):
        o_ref[...] = pltpu.roll(x_ref[...], 1, 1)

    x = jnp.tile(lax.iota(jnp.float32, 128)[None, :], (8, 1))
    out = pl.pallas_call(
        probe, out_shape=jax.ShapeDtypeStruct((8, 128), jnp.float32))(x)
    # jnp.roll(x, +1) puts x[..., 0] at lane 1.
    return bool(out[0, 1] == 0.0)


# --------------------------------------------------------------------------
# Pallas kernel: full DBlock forward (conv1 -> ReLU -> conv2, 1x1 shortcut,
# residual add, fused AvgPool2d(2)) for one group of images, layout (C, lanes).
# --------------------------------------------------------------------------
def dblock_kernel(x_ref, m_ref, p_ref, w1_ref, w2_ref, wsc_ref,
                  b1_ref, b2_ref, bsc_ref, o_ref, *, rotate):
    x = x_ref[...]                                   # (Cin_p, L) f32
    L = x.shape[-1]

    xr = jnp.maximum(x, 0.0)                         # preactivation ReLU (main branch only)

    def tap(h, t):
        # Lane view of the tap-t source pixel: XLU lane rotate (near-free VLIW
        # slot).  Out-of-image / wrapped destination lanes are zeroed by the
        # precomputed mask, so wrapping across row or image boundaries is safe.
        r = pltpu.roll(h, rotate[t], 1) if rotate[t] else h
        return r * m_ref[t, :h.shape[0]]             # f32 VPU (v5e has no bf16 VPU)

    def conv3x3(h, w_ref):
        C = h.shape[0]
        if C >= 128:
            # Scaling guard (real BigGAN channel counts): 9 accumulated matmuls,
            # never materializing the (9*C, L) im2col buffer (v7x: 64 MiB VMEM).
            acc = jnp.zeros((w_ref.shape[0], L), jnp.float32)
            for t in range(9):
                acc = acc + jnp.dot(w_ref[:, t * C:(t + 1) * C],
                                    tap(h, t).astype(jnp.bfloat16),
                                    preferred_element_type=jnp.float32)
            return acc
        # Small-C path: one MXU matmul per conv. Concat in f32 (aligned 8-sublane
        # pieces), single cast to bf16 for the MXU.
        col = jnp.concatenate([tap(h, t) for t in range(9)], axis=0)   # (9*C, L)
        return jnp.dot(w_ref[...], col.astype(jnp.bfloat16),
                       preferred_element_type=jnp.float32)

    h = conv3x3(xr, w1_ref) + b1_ref[...]            # conv1 + bias      (Ch, L)
    h = jnp.maximum(h, 0.0)                          # activation
    h = conv3x3(h, w2_ref) + b2_ref[...]             # conv2 + bias      (Cout, L)

    # Shortcut (preactivation=True): 1x1 conv on raw x; its downsample is fused
    # with the main branch's downsample below (avg-pool is linear).
    sc = jnp.dot(wsc_ref[...], x.astype(jnp.bfloat16),
                 preferred_element_type=jnp.float32) + bsc_ref[...]

    # Fused AvgPool2d(2) of (h + sc): constant selection matmul (four 0.25
    # entries per pooled pixel). Kept f32 to avoid extra rounding on the output.
    o_ref[...] = jnp.dot(h + sc, p_ref[...], preferred_element_type=jnp.float32)


# --------------------------------------------------------------------------
# Constant builders (wrapper side).
# --------------------------------------------------------------------------
def make_tap_masks(H, W, G, c_sub):
    """masks[t, :, g*HW + i*W + j] = 1 iff source pixel (i+dy, j+dx) of tap t is in-bounds.

    Pre-broadcast to c_sub sublanes and tiled over the G images of one block.
    """
    HW = H * W
    masks = np.zeros((9, c_sub, G * HW), np.float32)
    for ky in range(3):
        for kx in range(3):
            t = ky * 3 + kx
            dy, dx = ky - 1, kx - 1
            valid = np.zeros((H, W), np.float32)
            for i in range(H):
                for j in range(W):
                    if 0 <= i + dy < H and 0 <= j + dx < W:
                        valid[i, j] = 1.0
            masks[t] = np.tile(valid.reshape(-1), G)[None, :]
    return jnp.asarray(masks)


def make_pool_matrix(H, W, G):
    """(G*HW, G*HW/4) selection matrix: column q holds 0.25 at its 4 source pixels."""
    HW, Ho, Wo = H * W, H // 2, W // 2
    HWo = Ho * Wo
    P = np.zeros((G * HW, G * HWo), np.float32)
    for g in range(G):
        for io in range(Ho):
            for jo in range(Wo):
                q = g * HWo + io * Wo + jo
                for dy in range(2):
                    for dx in range(2):
                        P[g * HW + (2 * io + dy) * W + (2 * jo + dx), q] = 0.25
    return jnp.asarray(P)


def spectral_normalize(w_oihw, key, n_power_iterations=3, eps=1e-12):
    """W / sigma(W), sigma estimated by power iteration on W.reshape(Cout, -1)."""
    # TODO(synk): torch's spectral_norm keeps persistent u/v buffers across calls;
    # here sigma is recomputed with a deterministic power iteration each call.
    wm = w_oihw.reshape(w_oihw.shape[0], -1)
    u = jax.random.normal(key, (wm.shape[0],), dtype=jnp.float32)
    u = u / (jnp.linalg.norm(u) + eps)
    v = None
    for _ in range(n_power_iterations):
        v = wm.T @ u
        v = v / (jnp.linalg.norm(v) + eps)
        u = wm @ v
        u = u / (jnp.linalg.norm(u) + eps)
    sigma = u @ (wm @ v)
    return w_oihw / sigma


def _round_up(v, m):
    return (v + m - 1) // m * m


# --------------------------------------------------------------------------
# Wrapper: layout packing, BlockSpecs, pallas_call.
# --------------------------------------------------------------------------
def dblock_forward(x_nchw, w1, w2, wsc, b1, b2, bsc):
    N, Cin, H, W = x_nchw.shape
    Ch, Cout = w1.shape[0], w2.shape[0]
    assert H % 2 == 0 and W % 2 == 0
    HW, HWo = H * W, (H // 2) * (W // 2)

    # Images per grid block: fold batch into lanes. Target ~2048 full-res lanes
    # and at least 512 (so the fused-pool output stays >= 128 lanes / unmasked
    # stores). Blocks always hold WHOLE images (lane-wrap invariant).
    G = max(1, min(N, max(2048 // HW, -(-512 // HW))))
    while N % G:
        G -= 1
    L, Lp = G * HW, G * HWo
    num_blocks = N // G
    # NOTE(v7x): at toy sizes this can collapse to a single grid step (one TC
    # idle); at real BigGAN batch/spatial sizes num_blocks >= 2 and the
    # "parallel" axis shards across both TensorCores.

    # Channel padding: Cin -> multiple of 8 so every im2col tap starts on a
    # sublane-tile boundary (extra K is free on the MXU).
    Cin_p = _round_up(Cin, 8)
    c_sub = max(Cin_p, Ch)

    # Input layout: NCHW -> (Cin_p, N*HW), channels on sublanes, batch on lanes.
    x_lanes = jnp.transpose(x_nchw.reshape(N, Cin, HW), (1, 0, 2)).reshape(Cin, N * HW)
    x_lanes = jnp.pad(x_lanes.astype(jnp.float32), ((0, Cin_p - Cin), (0, 0)))

    # Weights (bf16, MXU-native): im2col layout w[o, t*C + i] = w_oihw[o, i, ky, kx],
    # tap t = ky*3 + kx (matches the kernel's column stacking order).
    def im2col_w(w_oihw, c_pad):
        o, i = w_oihw.shape[0], w_oihw.shape[1]
        wt = jnp.transpose(w_oihw, (0, 2, 3, 1))                     # (O, 3, 3, I)
        wt = jnp.pad(wt, ((0, 0), (0, 0), (0, 0), (0, c_pad - i)))
        return wt.reshape(o, 9 * c_pad).astype(jnp.bfloat16)

    w1t = im2col_w(w1, Cin_p)                                        # (Ch, 9*Cin_p)
    w2t = im2col_w(w2, Ch)                                           # (Cout, 9*Ch)
    wsct = jnp.pad(wsc.reshape(Cout, Cin),
                   ((0, 0), (0, Cin_p - Cin))).astype(jnp.bfloat16)  # (Cout, Cin_p)
    b1c = b1.reshape(Ch, 1).astype(jnp.float32)
    b2c = b2.reshape(Cout, 1).astype(jnp.float32)
    bscc = bsc.reshape(Cout, 1).astype(jnp.float32)

    masks = make_tap_masks(H, W, G, c_sub)        # (9, c_sub, L) f32
    poolm = make_pool_matrix(H, W, G)             # (L, Lp) f32

    # Per-tap lane-rotate amounts (resolved against the probed roll direction).
    shifts = tuple((ky - 1) * W + (kx - 1) for ky in range(3) for kx in range(3))
    left_rotate = _pltpu_roll_matches_jnp_roll()
    rotate = tuple(((-s) % L) if left_rotate else (s % L) for s in shifts)

    kern = functools.partial(dblock_kernel, rotate=rotate)

    out_lanes = pl.pallas_call(
        kern,
        out_shape=jax.ShapeDtypeStruct((Cout, N * HWo), jnp.float32),
        grid_spec=pltpu.PrefetchScalarGridSpec(
            num_scalar_prefetch=0,
            grid=(num_blocks,),
            in_specs=[
                pl.BlockSpec((Cin_p, L), lambda g: (0, g)),          # x (image group)
                pl.BlockSpec((9, c_sub, L), lambda g: (0, 0, 0)),    # tap masks (const)
                pl.BlockSpec((L, Lp), lambda g: (0, 0)),             # pool matrix (const)
                pl.BlockSpec((Ch, 9 * Cin_p), lambda g: (0, 0)),     # w1 (im2col, bf16)
                pl.BlockSpec((Cout, 9 * Ch), lambda g: (0, 0)),      # w2 (im2col, bf16)
                pl.BlockSpec((Cout, Cin_p), lambda g: (0, 0)),       # w_sc (1x1, bf16)
                pl.BlockSpec((Ch, 1), lambda g: (0, 0)),             # b1
                pl.BlockSpec((Cout, 1), lambda g: (0, 0)),           # b2
                pl.BlockSpec((Cout, 1), lambda g: (0, 0)),           # b_sc
            ],
            out_specs=pl.BlockSpec((Cout, Lp), lambda g: (0, g)),    # pooled, lane-dense
        ),
        compiler_params=pltpu.CompilerParams(
            dimension_semantics=("parallel",)),
    )(x_lanes, masks, poolm, w1t, w2t, wsct, b1c, b2c, bscc)

    # (Cout, N*HWo) -> NCHW (N, Cout, H/2, W/2)
    out = jnp.transpose(out_lanes.reshape(Cout, N, HWo), (1, 0, 2))
    return out.reshape(N, Cout, H // 2, W // 2)


# --------------------------------------------------------------------------
# Pure-JAX references (sanity checks only), mirroring the torch module.
#   matmul_dtype=f32  -> exact torch semantics
#   matmul_dtype=bf16 -> matching precision for the kernel's bf16 MXU operands
# --------------------------------------------------------------------------
def ref_forward(x_nchw, w1, w2, wsc, b1, b2, bsc, matmul_dtype=jnp.float32):
    prec = lax.Precision.HIGHEST if matmul_dtype == jnp.float32 else lax.Precision.DEFAULT

    def conv(h, w, b, pad):
        y = lax.conv_general_dilated(
            h.astype(matmul_dtype), w.astype(matmul_dtype),
            window_strides=(1, 1), padding=[(pad, pad), (pad, pad)],
            dimension_numbers=("NCHW", "OIHW", "NCHW"),
            preferred_element_type=jnp.float32, precision=prec)
        return y + b.reshape(1, -1, 1, 1)

    def pool(h):
        n, c, hh, ww = h.shape
        return h.reshape(n, c, hh // 2, 2, ww // 2, 2).mean(axis=(3, 5))

    h = jnp.maximum(x_nchw, 0.0)                 # preactivation
    h = conv(h, w1, b1, 1)                       # conv1
    h = jnp.maximum(h, 0.0)                      # activation
    h = conv(h, w2, b2, 1)                       # conv2
    h = pool(h)                                  # downsample (main)
    sc = pool(conv(x_nchw, wsc, bsc, 0))         # shortcut: conv_sc then pool
    return h + sc


# --------------------------------------------------------------------------
if __name__ == "__main__":
    N, Cin, Cout, H, W = 2, 4, 8, 16, 16
    Ch = Cout  # wide=True -> hidden_channels = out_channels

    key = jax.random.PRNGKey(0)
    ks = jax.random.split(key, 10)

    # PyTorch Conv2d weight layout is OIHW.
    w1 = jax.random.normal(ks[0], (Ch, Cin, 3, 3), jnp.float32) * 0.2
    w2 = jax.random.normal(ks[1], (Cout, Ch, 3, 3), jnp.float32) * 0.2
    wsc = jax.random.normal(ks[2], (Cout, Cin, 1, 1), jnp.float32) * 0.2
    b1 = jax.random.normal(ks[3], (Ch,), jnp.float32) * 0.1
    b2 = jax.random.normal(ks[4], (Cout,), jnp.float32) * 0.1
    bsc = jax.random.normal(ks[5], (Cout,), jnp.float32) * 0.1

    # spectral_norm(W) = W / sigma(W)
    w1 = spectral_normalize(w1, ks[6])
    w2 = spectral_normalize(w2, ks[7])
    wsc = spectral_normalize(wsc, ks[8])

    # PyTorch-style NCHW input.
    x = jax.random.normal(ks[9], (N, Cin, H, W), jnp.float32)

    out = dblock_forward(x, w1, w2, wsc, b1, b2, bsc)
    out = jax.block_until_ready(out)
    assert out.shape == (N, Cout, H // 2, W // 2), out.shape

    # Strict check vs matching-precision (bf16 matmul operands) reference, and a
    # loose check vs the pure-f32 torch-equivalent reference (kernel uses bf16
    # MXU operands, so a small drift vs f32 is expected).
    ref_bf16 = ref_forward(x, w1, w2, wsc, b1, b2, bsc, matmul_dtype=jnp.bfloat16)
    ref_f32 = ref_forward(x, w1, w2, wsc, b1, b2, bsc, matmul_dtype=jnp.float32)
    err_match = float(jnp.max(jnp.abs(out - ref_bf16)))
    err_exact = float(jnp.max(jnp.abs(out - ref_f32)))
    assert err_match < 1e-2, f"vs matching-precision ref: {err_match}"
    assert err_exact < 1e-1, f"vs f32 ref: {err_exact}"

    print("KERNEL_OK")
</pallas_src>

<mosaic_0001>
module attributes {stable_mosaic.version = 11 : i64} {
  func.func @probe(%arg0: memref<8x128xf32, #tpu.memory_space<vmem>>, %arg1: memref<8x128xf32, #tpu.memory_space<vmem>>) attributes {dimension_semantics = [], scalar_prefetch = 0 : i64, scratch_operands = 0 : i64, tpu.core_type = #tpu.core_type<tc>} {
    %c0 = arith.constant 0 : index
    %c0_0 = arith.constant 0 : index
    %0 = vector.load %arg0[%c0, %c0_0] : memref<8x128xf32, #tpu.memory_space<vmem>>, vector<8x128xf32>
    %c1_i32 = arith.constant 1 : i32
    %1 = tpu.dynamic_rotate %0 by %c1_i32 dim 1 : vector<8x128xf32>, i32 -> vector<8x128xf32>
    %c0_1 = arith.constant 0 : index
    %c0_2 = arith.constant 0 : index
    %2 = vector.load %arg1[%c0_1, %c0_2] : memref<8x128xf32, #tpu.memory_space<vmem>>, vector<8x128xf32>
    tpu.vector_store %arg1[%c0_1, %c0_2], %1 {strides = array<i32>} : memref<8x128xf32, #tpu.memory_space<vmem>>, vector<8x128xf32>,
    return
  }
}

</mosaic_0001>

<llo_original>
// kernel: tpu_custom_call.1
$region0: #{tpu_custom_call.1}
  #allocation0 [shape = 'u32[]', space=smem, size = 0x4, offset = 0x4, fixed_abs, tag = 'smem constant byte address 0x4 - core index']
  #allocation1 [shape = 'u32[144,128]{1,0:T(1,128)}', space=vmem, size = 0x12000, scoped, tag = 'internal scratch']
  %s0 = inlined_call_operand.hbm [shape: f32[8,128], index: 0, kind: input, shape index: {}]
  %s1 = inlined_call_operand.hbm [shape: f32[8,128], index: 1, kind: output, shape index: {}]
  %s2 = sld [smem:[#allocation0]]
  $region18: #{tpu_custom_call.1} parent=0
    _
  %s4 = ssub.s32 1, %s2
  %s5 = scalar_select 0, %s4, %s2
  $region1: #{tpu_custom_call.1} parent=0
    #allocation2 [shape = 'u8[4096]{0}', space=vmem, size = 0x1000, scoped, tag = 'input window, operand 0, single buffered']
    #allocation3 [shape = 's32[1]{0}', space=sflag, size = 0x4, scoped, tag = 'scoped memory for tpu_custom_call.1']
    #allocation4 [shape = 's32[1]{0}', space=sflag, size = 0x4, scoped, tag = 'scoped memory for tpu_custom_call.1']
    #allocation5 [shape = 'u8[4096]{0}', space=vmem, size = 0x1000, scoped, tag = 'output window, operand 0, single buffered']
    %6 = vsyncpa [#allocation3], 0
    %7 = vsyncpa [#allocation4], 0
    // Predicated region
    $region2: #{tpu_custom_call.1} parent=1 // pred_check
      _
    $region3: #{tpu_custom_call.1} parent=1 // pred_check_branch
      %9 = sbr.rel (0) target = $region5
    $region4: #{tpu_custom_call.1} parent=1 // pred_region
      %s11 = ssub.s32 128, 128
      %12 = vsyncadd [#allocation3], %s11
      %s14 = sshll.u32 [#allocation2], 4
      %s15 = int_to_ptr.vmem [resolvable:$true] %s14
      %17 = dma.hbm_to_vmem [thread:$0]  %s0, 128, %s15, [#allocation3]
    $region5: #{tpu_custom_call.1} parent=1 // pred_fallthru
      _
    // Predicated region
    $region6: #{tpu_custom_call.1} parent=1 // pred_check
      _
    $region7: #{tpu_custom_call.1} parent=1 // pred_check_branch
      %19 = sbr.rel (0) target = $region9
    $region8: #{tpu_custom_call.1} parent=1 // pred_region
      %20 = dma.done [#allocation3], 128
    $region9: #{tpu_custom_call.1} parent=1 // pred_fallthru
      _
    %v21 = vld [vmem:[#allocation2] sm:$0xff]
    %22 = vrot.lane.b32.xlu0 %v21, 1
    %v23 = vpop.permute.xlu0 %22
    %24 = vst [vmem:[#allocation5] sm:$0xff] %v23
    // Predicated region
    $region10: #{tpu_custom_call.1} parent=1 // pred_check
      _
    $region11: #{tpu_custom_call.1} parent=1 // pred_check_branch
      %26 = sbr.rel (0) target = $region13
    $region12: #{tpu_custom_call.1} parent=1 // pred_region
      %s28 = ssub.s32 128, 128
      %29 = vsyncadd [#allocation4], %s28
      %s31 = sshll.u32 [#allocation5], 4
      %s32 = int_to_ptr.vmem [resolvable:$true] %s31
      %34 = dma.vmem_to_hbm [thread:$0]  %s32, 128, %s1, [#allocation4]
    $region13: #{tpu_custom_call.1} parent=1 // pred_fallthru
      _
    // Predicated region
    $region14: #{tpu_custom_call.1} parent=1 // pred_check
      _
    $region15: #{tpu_custom_call.1} parent=1 // pred_check_branch
      %36 = sbr.rel (0) target = $region17
    $region16: #{tpu_custom_call.1} parent=1 // pred_region
      %37 = dma.done [#allocation4], 128
    $region17: #{tpu_custom_call.1} parent=1 // pred_fallthru
      _
    %38 = vsyncpa [#allocation3], 1
    %39 = vsyncpa [#allocation4], 1

</llo_original>
